<compile_context>
chip_gen: v7x
topology: tpu7x:2x2x1
jax: 0.10.0
libtpu: 0.0.40
codegen_flags: <defaults>
</compile_context>

<pallas_src>
import jax
import jax.numpy as jnp
from jax.experimental import pallas as pl
from jax.experimental.pallas import tpu as pltpu


def _blender_kernel(w_ref, data_ref, o_ref):
    # w_ref:    SMEM (N,)          f32 -- precomputed softmax weights (scalars)
    # data_ref: VMEM (N, TL, 128)  native dtype -- tile of flattened data
    # o_ref:    VMEM (TL, 128)     f32 -- weighted sum over the slot axis
    n_slots = data_ref.shape[0]
    acc = w_ref[0] * data_ref[0].astype(jnp.float32)
    for n in range(1, n_slots):                       # static unroll over small N
        acc = acc + w_ref[n] * data_ref[n].astype(jnp.float32)
    o_ref[...] = acc.astype(o_ref.dtype)


def _pick_tile_l(L, n_slots, in_itemsize, out_itemsize,
                 vmem_budget_bytes=20 << 20, max_tile=4096):
    """Largest tile_l (rows of 128 lanes) that fits a double-buffered VMEM budget."""
    # Double-buffered bytes per L-row: 2 * (N inputs + 1 output) * 128 lanes.
    per_row = 2 * (n_slots * in_itemsize + out_itemsize) * 128
    cap = max(1, min(max_tile, vmem_budget_bytes // per_row, L))
    if L >= 16:
        cap = min(cap, L // 2)  # keep >= 2 grid steps so v7x megacore can shard
    for t in range(cap, 0, -1):
        # (8,128) rule on the last two block dims: tile_l % 8 == 0 or full extent.
        if L % t == 0 and (t % 8 == 0 or t == L):
            return t
    return L


def blender_forward(logits, data):
    """logits: (N, 1, 1, 1, 1); data: (N, B, C, H, W) -> (B, C, H, W) float32."""
    N, B, C, H, W = data.shape
    total = B * C * H * W

    # Softmax over the N blend logits: tiny, done once outside the grid loop.
    w = jax.nn.softmax(logits.reshape(N).astype(jnp.float32), axis=0)  # (N,) f32

    # Stream data in its native dtype (no wrapper-side upcast); accumulate in f32.
    flat = data.reshape(N, total)
    pad = (-total) % 128
    if pad:
        flat = jnp.pad(flat, ((0, 0), (0, pad)))  # zero rows don't affect the sum
    padded_total = total + pad
    L = padded_total // 128
    d3 = flat.reshape(N, L, 128)

    out_dtype = jnp.promote_types(data.dtype, jnp.float32)
    in_item = jnp.dtype(d3.dtype).itemsize
    out_item = jnp.dtype(out_dtype).itemsize
    tile_l = _pick_tile_l(L, N, in_item, out_item)

    pipeline_bytes = 2 * (N * in_item + out_item) * tile_l * 128
    vmem_limit = int(min(max(pipeline_bytes * 1.5 + (8 << 20), 32 << 20), 56 << 20))

    out2 = pl.pallas_call(
        _blender_kernel,
        out_shape=jax.ShapeDtypeStruct((L, 128), out_dtype),
        grid_spec=pltpu.PrefetchScalarGridSpec(
            num_scalar_prefetch=0,
            grid=(L // tile_l,),
            in_specs=[
                # Blend weights live in SMEM: cheap scalar reads, no per-tile softmax.
                pl.BlockSpec(memory_space=pltpu.MemorySpace.SMEM),
                # Large lane-dense data tile, auto double-buffered by BlockSpec.
                pl.BlockSpec((N, tile_l, 128), lambda i: (0, i, 0)),
            ],
            out_specs=pl.BlockSpec((tile_l, 128), lambda i: (i, 0)),
        ),
        compiler_params=pltpu.CompilerParams(
            dimension_semantics=("parallel",),
            vmem_limit_bytes=vmem_limit,
        ),
    )(w, d3)

    out_flat = out2.reshape(padded_total)
    if pad:
        out_flat = out_flat[:total]
    return out_flat.reshape(B, C, H, W)


if __name__ == "__main__":
    # Small shapes consistent with the module: N blend slots over (B, C, H, W) data.
    N, B, C, H, W = 4, 2, 4, 16, 16

    key = jax.random.PRNGKey(0)
    k_data, _ = jax.random.split(key)

    # Deterministic parameter init: PyTorch __init__ uses ones(N,1,1,1,1).
    logits = jnp.ones((N, 1, 1, 1, 1), dtype=jnp.float32)
    data = jax.random.normal(k_data, (N, B, C, H, W), dtype=jnp.float32)

    out = blender_forward(logits, data)
    out = jax.block_until_ready(out)

    # Reference check in plain JAX (same math as the PyTorch forward).
    coeff = jax.nn.softmax(logits, axis=0)
    ref = jnp.sum(coeff * data, axis=0)
    assert out.shape == (B, C, H, W)
    assert jnp.allclose(out, ref, atol=1e-5, rtol=1e-5)

    print("KERNEL_OK")
</pallas_src>

<mosaic_0001>
module attributes {stable_mosaic.version = 11 : i64} {
  func.func @_blender_kernel(%arg0: i32, %arg1: memref<4xf32, #tpu.memory_space<smem>>, %arg2: memref<4x8x128xf32, #tpu.memory_space<vmem>>, %arg3: memref<8x128xf32, #tpu.memory_space<vmem>>) attributes {dimension_semantics = [#tpu.dimension_semantics<parallel>], iteration_bounds = array<i64: 2>, scalar_prefetch = 0 : i64, scratch_operands = 0 : i64, tpu.core_type = #tpu.core_type<tc>, window_params = [{transform_indices = @transform_0, window_bounds = array<i64: 4>}, {transform_indices = @transform_1, window_bounds = array<i64: 4, 8, 128>}, {transform_indices = @transform_2, window_bounds = array<i64: 8, 128>}]} {
    %c0 = arith.constant 0 : index
    %0 = memref.load %arg1[%c0] : memref<4xf32, #tpu.memory_space<smem>>
    %c0_0 = arith.constant 0 : index
    %c0_1 = arith.constant 0 : index
    %c0_2 = arith.constant 0 : index
    %1 = vector.load %arg2[%c0_0, %c0_1, %c0_2] : memref<4x8x128xf32, #tpu.memory_space<vmem>>, vector<1x8x128xf32>
    %2 = vector.shape_cast %1 : vector<1x8x128xf32> to vector<8x128xf32>
    %3 = vector.broadcast %0 : f32 to vector<8x128xf32>
    %4 = arith.mulf %3, %2 : vector<8x128xf32>
    %c1 = arith.constant 1 : index
    %5 = memref.load %arg1[%c1] : memref<4xf32, #tpu.memory_space<smem>>
    %c1_3 = arith.constant 1 : index
    %c0_4 = arith.constant 0 : index
    %c0_5 = arith.constant 0 : index
    %6 = vector.load %arg2[%c1_3, %c0_4, %c0_5] : memref<4x8x128xf32, #tpu.memory_space<vmem>>, vector<1x8x128xf32>
    %7 = vector.shape_cast %6 : vector<1x8x128xf32> to vector<8x128xf32>
    %8 = vector.broadcast %5 : f32 to vector<8x128xf32>
    %9 = arith.mulf %8, %7 : vector<8x128xf32>
    %10 = arith.addf %4, %9 : vector<8x128xf32>
    %c2 = arith.constant 2 : index
    %11 = memref.load %arg1[%c2] : memref<4xf32, #tpu.memory_space<smem>>
    %c2_6 = arith.constant 2 : index
    %c0_7 = arith.constant 0 : index
    %c0_8 = arith.constant 0 : index
    %12 = vector.load %arg2[%c2_6, %c0_7, %c0_8] : memref<4x8x128xf32, #tpu.memory_space<vmem>>, vector<1x8x128xf32>
    %13 = vector.shape_cast %12 : vector<1x8x128xf32> to vector<8x128xf32>
    %14 = vector.broadcast %11 : f32 to vector<8x128xf32>
    %15 = arith.mulf %14, %13 : vector<8x128xf32>
    %16 = arith.addf %10, %15 : vector<8x128xf32>
    %c3 = arith.constant 3 : index
    %17 = memref.load %arg1[%c3] : memref<4xf32, #tpu.memory_space<smem>>
    %c3_9 = arith.constant 3 : index
    %c0_10 = arith.constant 0 : index
    %c0_11 = arith.constant 0 : index
    %18 = vector.load %arg2[%c3_9, %c0_10, %c0_11] : memref<4x8x128xf32, #tpu.memory_space<vmem>>, vector<1x8x128xf32>
    %19 = vector.shape_cast %18 : vector<1x8x128xf32> to vector<8x128xf32>
    %20 = vector.broadcast %17 : f32 to vector<8x128xf32>
    %21 = arith.mulf %20, %19 : vector<8x128xf32>
    %22 = arith.addf %16, %21 : vector<8x128xf32>
    %c0_12 = arith.constant 0 : index
    %c0_13 = arith.constant 0 : index
    %23 = vector.load %arg3[%c0_12, %c0_13] : memref<8x128xf32, #tpu.memory_space<vmem>>, vector<8x128xf32>
    tpu.vector_store %arg3[%c0_12, %c0_13], %22 {strides = array<i32>} : memref<8x128xf32, #tpu.memory_space<vmem>>, vector<8x128xf32>,
    return
  }
  func.func @transform_0(%arg0: i32) -> i32 {
    %c0_i32 = arith.constant 0 : i32
    %c0_i32_0 = arith.constant 0 : i32
    return %c0_i32 : i32
  }
  func.func @transform_1(%arg0: i32) -> (i32, i32, i32) {
    %c0_i32 = arith.constant 0 : i32
    %c0_i32_0 = arith.constant 0 : i32
    %c0_i32_1 = arith.constant 0 : i32
    return %c0_i32, %arg0, %c0_i32_0 : i32, i32, i32
  }
  func.func @transform_2(%arg0: i32) -> (i32, i32) {
    %c0_i32 = arith.constant 0 : i32
    %c0_i32_0 = arith.constant 0 : i32
    return %arg0, %c0_i32 : i32, i32
  }
}

</mosaic_0001>

<llo_original>
// kernel: tpu_custom_call.1
$region0: #{tpu_custom_call.1}
  #allocation0 [shape = 'u32[]', space=smem, size = 0x4, offset = 0x4, fixed_abs, tag = 'smem constant byte address 0x4 - core index']
  #allocation1 [shape = 'u32[144,128]{1,0:T(1,128)}', space=vmem, size = 0x12000, scoped, tag = 'internal scratch']
  %s0 = inlined_call_operand.hbm [shape: f32[4], index: 0, kind: input, shape index: {}]
  %s1 = inlined_call_operand.hbm [shape: f32[4,16,128], index: 1, kind: input, shape index: {}]
  %s2 = inlined_call_operand.hbm [shape: f32[16,128], index: 2, kind: output, shape index: {}]
  %s3 = sld [smem:[#allocation0]]
  $region49: #{tpu_custom_call.1} parent=0
    _
  %s5 = ssub.s32 1, %s3
  %s6 = scalar_select 0, %s5, %s3
  $region1: #{tpu_custom_call.1} parent=0
    #allocation2 [shape = 'u8[512]{0}', space=smem, size = 0x200, scoped, tag = 'input window, operand 0, single buffered']
    #allocation3 [shape = 's32[2]{0}', space=sflag, size = 0x8, scoped, tag = 'scoped memory for tpu_custom_call.1']
    #allocation4 [shape = 's32[2]{0}', space=sflag, size = 0x8, scoped, tag = 'scoped memory for tpu_custom_call.1']
    #allocation5 [shape = 's32[2]{0}', space=sflag, size = 0x8, scoped, tag = 'scoped memory for tpu_custom_call.1']
    #allocation6 [shape = 'u8[32768]{0}', space=vmem, size = 0x8000, scoped, tag = 'input window, operand 1']
    #allocation7 [shape = 'u8[8192]{0}', space=vmem, size = 0x2000, scoped, tag = 'output window, operand 0']
    %7 = vsyncpa [#allocation5], 0
    %8 = vsyncpa [#allocation3], 0
    %s9 = scalar_lea.sflag [#allocation3], 1
    %10 = vsyncpa %s9, 0
    %11 = vsyncpa [#allocation4], 0
    %s12 = scalar_lea.sflag [#allocation4], 1
    %13 = vsyncpa %s12, 0
    loop: start=0, step=1, limit=4
    $region2: #{tpu_custom_call.1} parent=1 // loop_pre_header
      _
    $region3: #{tpu_custom_call.1} parent=1 // loop_header
      %s15 = sphi 0, %s19
      %p16 = scmp.ge.s32.totalorder %s15, 4
      %s23 = sphi 0, %s23
      %s25 = sphi 0, %s23
      %s26 = sphi 0, %s25
      %s40 = sphi 0, %s26
      %s46 = sphi 0, %s48
      %s49 = sphi 0, %s46
      %s50 = sphi 0, %s49
      %s66 = sphi 0, %s50
      %s72 = sphi 0, %s74
      %s75 = sphi 0, %s72
      %s76 = sphi 0, %s75
      %s92 = sphi 0, %s76
    $region4: #{tpu_custom_call.1} parent=1 // loop_header_branch
      %18 = sbr.rel (%p16) target = $region8
    $region5: #{tpu_custom_call.1} parent=1 // loop_body
      %s20 = ssub.s32 %s15, 1
      %s21 = ssub.s32 %s15, 2
      %s22 = sadd.s32 %s15, 1
      %s24 = sadd.s32 %s23, 1
      %p27 = scmp.eq.s32.totalorder %s15, 1
      %p28 = scmp.ne.s32.totalorder %s23, %s25
      %p29 = scmp.eq.s32.totalorder %s15, 0
      %p30 = por %p28, %p29
      %p31 = scmp.ne.s32.totalorder %s23, %s25
      %p32 = scmp.eq.s32.totalorder %s20, 1
      %p33 = por %p31, %p32
      %p34 = scmp.ne.s32.totalorder %s25, %s26
      %p35 = scmp.eq.s32.totalorder %s20, 0
      %p36 = por %p34, %p35
      %p37 = scmp.ne.s32.totalorder %s25, %s26
      %p38 = scmp.eq.s32.totalorder %s21, 1
      %p39 = por %p37, %p38
      %p41 = scmp.ne.s32.totalorder %s26, %s40
      %p42 = scmp.eq.s32.totalorder %s21, 0
      %p43 = por %p41, %p42
      %s44 = ssub.s32 %s15, %s22
      %p45 = scmp.eq.s32.totalorder %s44, 0
      %s47 = sadd.s32 %s46, 1
      %s48 = scalar_select %p45, %s46, %s47
      %p51 = pneg %p45
      %p52 = scmp.eq.s32.totalorder %s15, 1
      %p53 = por %p51, %p52
      %p54 = scmp.ne.s32.totalorder %s46, %s49
      %p55 = scmp.eq.s32.totalorder %s15, 0
      %p56 = por %p54, %p55
      %p57 = scmp.ne.s32.totalorder %s46, %s49
      %p58 = scmp.eq.s32.totalorder %s20, 1
      %p59 = por %p57, %p58
      %p60 = scmp.ne.s32.totalorder %s49, %s50
      %p61 = scmp.eq.s32.totalorder %s20, 0
      %p62 = por %p60, %p61
      %p63 = scmp.ne.s32.totalorder %s49, %s50
      %p64 = scmp.eq.s32.totalorder %s21, 1
      %p65 = por %p63, %p64
      %p67 = scmp.ne.s32.totalorder %s50, %s66
      %p68 = scmp.eq.s32.totalorder %s21, 0
      %p69 = por %p67, %p68
      %s70 = ssub.s32 %s15, %s22
      %p71 = scmp.eq.s32.totalorder %s70, 0
      %s73 = sadd.s32 %s72, 1
      %s74 = scalar_select %p71, %s72, %s73
      %p77 = pneg %p71
      %p78 = scmp.eq.s32.totalorder %s15, 1
      %p79 = por %p77, %p78
      %p80 = scmp.ne.s32.totalorder %s72, %s75
      %p81 = scmp.eq.s32.totalorder %s15, 0
      %p82 = por %p80, %p81
      %p83 = scmp.ne.s32.totalorder %s72, %s75
      %p84 = scmp.eq.s32.totalorder %s20, 1
      %p85 = por %p83, %p84
      %p86 = scmp.ne.s32.totalorder %s75, %s76
      %p87 = scmp.eq.s32.totalorder %s20, 0
      %p88 = por %p86, %p87
      %p89 = scmp.ne.s32.totalorder %s75, %s76
      %p90 = scmp.eq.s32.totalorder %s21, 1
      %p91 = por %p89, %p90
      %p93 = scmp.ne.s32.totalorder %s76, %s92
      %p94 = scmp.eq.s32.totalorder %s21, 0
      %p95 = por %p93, %p94
      %p96 = scmp.le.s32.totalorder 1, %s15
      %p97 = scmp.lt.s32.totalorder %s15, 3
      %p98 = pnand %p96, %p97
      %p99 = pneg %p98
      // Predicated region
      $region9: #{tpu_custom_call.1} parent=5 // pred_check
        _
      $region10: #{tpu_custom_call.1} parent=5 // pred_check_branch
        %101 = sbr.rel (%p98) target = $region12
      $region11: #{tpu_custom_call.1} parent=5 // pred_region
        %s102 = ssub.s32 %s15, 1
        // Predicated region
        $region13: #{tpu_custom_call.1} parent=11 // pred_check
          %p103 = pneg %p36
        $region14: #{tpu_custom_call.1} parent=11 // pred_check_branch
          %105 = sbr.rel (%p103) target = $region16
        $region15: #{tpu_custom_call.1} parent=11 // pred_region
          %s107 = ssub.s32 16, 16
          %108 = vsyncadd [#allocation5], %s107
          %111 = dma.hbm_to_smem %s0, 16, [#allocation2], [#allocation5]
        $region16: #{tpu_custom_call.1} parent=11 // pred_fallthru
          _
      $region12: #{tpu_custom_call.1} parent=5 // pred_fallthru
        _
      %p112 = scmp.lt.s32.totalorder %s15, 2
      // Predicated region
      $region17: #{tpu_custom_call.1} parent=5 // pred_check
        %p113 = pneg %p112
      $region18: #{tpu_custom_call.1} parent=5 // pred_check_branch
        %115 = sbr.rel (%p113) target = $region20
      $region19: #{tpu_custom_call.1} parent=5 // pred_region
        // Predicated region
        $region21: #{tpu_custom_call.1} parent=19 // pred_check
          %p116 = pneg %p56
        $region22: #{tpu_custom_call.1} parent=19 // pred_check_branch
          %118 = sbr.rel (%p116) target = $region24
        $region23: #{tpu_custom_call.1} parent=19 // pred_region
          %s119 = sand.u32 %s46, 1
          %s120 = scalar_lea.sflag [#allocation3], %s119
          %s121 = sand.u32 %s46, 1
          %s122 = smul.addr %s121, 32
          %s123 = scalar_lea.vmem [#allocation6], %s122
          %s125 = ssub.s32 512, 512
          %126 = vsyncadd %s120, %s125
          %s127 = smul.addr %s15, 128
          %s128 = scalar_lea.hbm %s1, %s127
          %s129 = sshll.u32 %s123, 4
          %s130 = int_to_ptr.vmem [resolvable:$true] %s129
          %135 = dma.hbm_to_vmem [thread:$0]  %s128, 512, %s130, %s120, 256, 128, 8
        $region24: #{tpu_custom_call.1} parent=19 // pred_fallthru
          _
      $region20: #{tpu_custom_call.1} parent=5 // pred_fallthru
        _
      %p136 = scmp.le.s32.totalorder 1, %s15
      %p137 = scmp.lt.s32.totalorder %s15, 3
      %p138 = pnand %p136, %p137
      %p139 = pneg %p138
      // Predicated region
      $region25: #{tpu_custom_call.1} parent=5 // pred_check
        _
      $region26: #{tpu_custom_call.1} parent=5 // pred_check_branch
        %141 = sbr.rel (%p138) target = $region28
      $region27: #{tpu_custom_call.1} parent=5 // pred_region
        %s142 = ssub.s32 %s15, 1
        // Predicated region
        $region29: #{tpu_custom_call.1} parent=27 // pred_check
          %p143 = pneg %p36
        $region30: #{tpu_custom_call.1} parent=27 // pred_check_branch
          %145 = sbr.rel (%p143) target = $region32
        $region31: #{tpu_custom_call.1} parent=27 // pred_region
          %146 = dma.done [#allocation5], 16
        $region32: #{tpu_custom_call.1} parent=27 // pred_fallthru
          _
        %s147 = sand.u32 %s49, 1
        %s148 = scalar_lea.sflag [#allocation3], %s147
        %s149 = sand.u32 %s49, 1
        %s150 = smul.addr %s149, 32
        %s151 = scalar_lea.vmem [#allocation6], %s150
        // Predicated region
        $region33: #{tpu_custom_call.1} parent=27 // pred_check
          %p152 = pneg %p62
        $region34: #{tpu_custom_call.1} parent=27 // pred_check_branch
          %154 = sbr.rel (%p152) target = $region36
        $region35: #{tpu_custom_call.1} parent=27 // pred_region
          %155 = dma.done %s148, 512
        $region36: #{tpu_custom_call.1} parent=27 // pred_fallthru
          _
        %156 = sfence
        %p157 = pneg %p36
        %p158 = pneg %p33
        %s159 = sand.u32 %s49, 1
        %s160 = scalar_lea.sflag [#allocation3], %s159
        %s161 = sand.u32 %s49, 1
        %s162 = smul.addr %s161, 32
        %s163 = scalar_lea.vmem [#allocation6], %s162
        %p164 = pneg %p62
        %p165 = pneg %p59
        %p166 = pneg %p88
        %p167 = pneg %p85
        %s168 = sand.u32 %s75, 1
        %s169 = scalar_lea.sflag [#allocation4], %s168
        %s170 = sand.u32 %s75, 1
        %s171 = smul.addr %s170, 8
        %s172 = scalar_lea.vmem [#allocation7], %s171
        %s173 = sld [smem:[#allocation2]]
        %v174 = vld [vmem:[%s151] sm:$0xff]
        %v175 = vstv %s173
        %v176 = vmul.f32 %v175, %v174
        %s177 = sld [smem:[#allocation2 + $0x1]]
        %s178 = scalar_lea.vmem %s151, 8 [#allocation6]
        %v179 = vld [vmem:[%s178] sm:$0xff]
        %v180 = vstv %s177
        %v181 = vmul.f32 %v180, %v179
        %v182 = vadd.f32 %v176, %v181
        %s183 = sld [smem:[#allocation2 + $0x2]]
        %s184 = scalar_lea.vmem %s151, 16 [#allocation6]
        %v185 = vld [vmem:[%s184] sm:$0xff]
        %v186 = vstv %s183
        %v187 = vmul.f32 %v186, %v185
        %v188 = vadd.f32 %v182, %v187
        %s189 = sld [smem:[#allocation2 + $0x3]]
        %s190 = scalar_lea.vmem %s151, 24 [#allocation6]
        %v191 = vld [vmem:[%s190] sm:$0xff]
        %v192 = vstv %s189
        %v193 = vmul.f32 %v192, %v191
        %v194 = vadd.f32 %v188, %v193
        %195 = vst [vmem:[%s172] sm:$0xff] %v194
        %s196 = sand.u32 %s75, 1
        %s197 = scalar_lea.sflag [#allocation4], %s196
        %s198 = sand.u32 %s75, 1
        %s199 = smul.addr %s198, 8
        %s200 = scalar_lea.vmem [#allocation7], %s199
        // Predicated region
        $region37: #{tpu_custom_call.1} parent=27 // pred_check
          %p201 = pneg %p85
        $region38: #{tpu_custom_call.1} parent=27 // pred_check_branch
          %203 = sbr.rel (%p201) target = $region40
        $region39: #{tpu_custom_call.1} parent=27 // pred_region
          %s205 = ssub.s32 128, 128
          %206 = vsyncadd %s197, %s205
          %s207 = smul.addr %s20, 128
          %s208 = scalar_lea.hbm %s2, %s207
          %s210 = sshll.u32 %s200, 4
          %s211 = int_to_ptr.vmem [resolvable:$true] %s210
          %213 = dma.vmem_to_hbm [thread:$0]  %s211, 128, %s208, %s197
        $region40: #{tpu_custom_call.1} parent=27 // pred_fallthru
          _
      $region28: #{tpu_custom_call.1} parent=5 // pred_fallthru
        _
      %p214 = scmp.le.s32.totalorder 2, %s15
      // Predicated region
      $region41: #{tpu_custom_call.1} parent=5 // pred_check
        %p215 = pneg %p214
      $region42: #{tpu_custom_call.1} parent=5 // pred_check_branch
        %217 = sbr.rel (%p215) target = $region44
      $region43: #{tpu_custom_call.1} parent=5 // pred_region
        %s218 = ssub.s32 %s15, 2
        // Predicated region
        $region45: #{tpu_custom_call.1} parent=43 // pred_check
          %p219 = pneg %p91
        $region46: #{tpu_custom_call.1} parent=43 // pred_check_branch
          %221 = sbr.rel (%p219) target = $region48
        $region47: #{tpu_custom_call.1} parent=43 // pred_region
          %s222 = sand.u32 %s76, 1
          %s223 = scalar_lea.sflag [#allocation4], %s222
          %s224 = sand.u32 %s76, 1
          %s225 = smul.addr %s224, 8
          %s226 = scalar_lea.vmem [#allocation7], %s225
          %227 = dma.done %s223, 128
        $region48: #{tpu_custom_call.1} parent=43 // pred_fallthru
          _
      $region44: #{tpu_custom_call.1} parent=5 // pred_fallthru
        _
    $region6: #{tpu_custom_call.1} parent=1 // loop_footer
      %s19 = sadd.s32 1, %s15
    $region7: #{tpu_custom_call.1} parent=1 // loop_footer_branch
      %14 = sbr.rel target = $region3
    $region8: #{tpu_custom_call.1} parent=1 // loop_exit
      _
    %228 = vsyncpa [#allocation3], 1
    %s229 = scalar_lea.sflag [#allocation3], 1
    %230 = vsyncpa %s229, 1
    %231 = vsyncpa [#allocation4], 1
    %s232 = scalar_lea.sflag [#allocation4], 1
    %233 = vsyncpa %s232, 1
    %234 = vsyncpa [#allocation5], 1
    %s235 = scalar_lea.sflag [#allocation5], 1
    %236 = vsyncpa %s235, 1

</llo_original>
